<compile_context>
chip_gen: v7x
topology: tpu7x:2x2x1
jax: 0.10.0
libtpu: 0.0.40
codegen_flags: <defaults>
</compile_context>

<pallas_src>
import functools

import jax
import jax.numpy as jnp
from jax import lax
from jax.experimental import pallas as pl
from jax.experimental.pallas import tpu as pltpu


def _cbam_kernel(wsp_ref, x_ref, w1_ref, w2_ref, o_ref, *, H, W):
    # x_ref block: (NB, C, HW)  -- lane-dense flattened spatial layout.
    xb = x_ref[...].astype(jnp.float32)            # (NB, C, HW)
    NB, C, HW = xb.shape

    # ---------------- Channel attention ----------------
    avg = jnp.mean(xb, axis=2)                     # (NB, C)
    mx = jnp.max(xb, axis=2)                       # (NB, C)
    # Batch avg- and max-pooled vectors of every batch element through the
    # shared MLP in a single pair of matmuls (amortizes the tiny MXU pass).
    pooled = jnp.concatenate([avg, mx], axis=0)    # (2*NB, C)

    w1 = w1_ref[...]                               # (Cr, C)
    w2 = w2_ref[...]                               # (C, Cr)

    dn = (((1,), (1,)), ((), ()))                  # contract on last dim of both
    hidden = jnp.maximum(
        lax.dot_general(pooled, w1, dn, preferred_element_type=jnp.float32),
        0.0)                                       # (2*NB, Cr)
    out2 = lax.dot_general(hidden, w2, dn,
                           preferred_element_type=jnp.float32)   # (2*NB, C)
    ca = jax.nn.sigmoid(out2[:NB] + out2[NB:])     # (NB, C)

    x_ca = xb * ca[:, :, None]                     # (NB, C, HW)

    # ---------------- Spatial attention ----------------
    mean_c = jnp.mean(x_ca, axis=1)                # (NB, HW)
    max_c = jnp.max(x_ca, axis=1)                  # (NB, HW)
    feats = (mean_c, max_c)

    # Boundary masks hoisted out of the tap loop: only 2 iotas + 4 compares.
    p_idx = lax.broadcasted_iota(jnp.int32, (NB, HW), 1)   # flattened position
    j_idx = p_idx % W                                       # column index
    row_mask = {-1: p_idx >= W, 0: None, 1: p_idx < (H - 1) * W}
    col_mask = {-1: j_idx >= 1, 0: None, 1: j_idx < (W - 1)}

    # 3x3 conv (padding=1, bias=False) on the flattened layout: each tap is a
    # single lane-roll by di*W + dj, with invalid (zero-padded) positions
    # masked out.  Wherever the 2D source index is valid the flattened roll
    # never wraps, so the cyclic roll is exact there.
    conv = jnp.zeros((NB, HW), jnp.float32)
    for c in range(2):                             # (mean, max) input channels
        f = feats[c]
        for ki in range(3):
            for kj in range(3):
                di, dj = ki - 1, kj - 1
                s = di * W + dj                    # flattened source offset
                tap = f if s == 0 else pltpu.roll(f, shift=(-s) % HW, axis=1)
                rm, cm = row_mask[di], col_mask[dj]
                if rm is not None and cm is not None:
                    m = rm & cm
                else:
                    m = rm if rm is not None else cm
                if m is not None:
                    tap = jnp.where(m, tap, 0.0)
                w = wsp_ref[c * 9 + ki * 3 + kj]   # scalar from SMEM
                conv = conv + w * tap

    sa = jax.nn.sigmoid(conv)                      # (NB, HW)
    out = x_ca * sa[:, None, :]                    # (NB, C, HW)
    o_ref[...] = out.astype(o_ref.dtype)


def cbam_block(x, w_fc1, w_fc2, w_spatial):
    """x: (N, C, H, W); w_fc1: (C//r, C); w_fc2: (C, C//r); w_spatial: (1,2,3,3)."""
    N, C, H, W = x.shape
    HW = H * W
    Cr = w_fc1.shape[0]                            # derive ratio from the weights
    assert w_fc1.shape == (Cr, C), w_fc1.shape
    assert w_fc2.shape == (C, Cr), w_fc2.shape
    assert w_spatial.shape == (1, 2, 3, 3), w_spatial.shape

    x_flat = x.reshape(N, C, HW)                   # lane-dense spatial layout
    wsp_flat = w_spatial.reshape(-1).astype(jnp.float32)   # (18,) -> SMEM

    # Fold batch elements into one grid step so each step moves a decent block
    # (per-step overhead ~0.35us dominates tiny tiles).  For the toy shapes the
    # whole batch fits in a single step.
    item_bytes = C * HW * x.dtype.itemsize
    target_bytes = 2 * 1024 * 1024
    nb = 1
    for d in range(1, N + 1):
        if N % d == 0 and d * item_bytes <= target_bytes:
            nb = d

    # VMEM budget: in + out, double-buffered, plus headroom.  Only override the
    # default scoped limit when the block actually needs it (keeps v7x safe).
    block_bytes = nb * item_bytes
    need = 4 * block_bytes + (4 << 20)
    vmem_limit = None if need <= (16 << 20) else int(need)

    kernel = functools.partial(_cbam_kernel, H=H, W=W)

    out_flat = pl.pallas_call(
        kernel,
        out_shape=jax.ShapeDtypeStruct((N, C, HW), x.dtype),
        grid_spec=pltpu.PrefetchScalarGridSpec(
            num_scalar_prefetch=0,
            grid=(N // nb,),
            in_specs=[
                pl.BlockSpec(memory_space=pltpu.MemorySpace.SMEM),   # 3x3 weights
                pl.BlockSpec((nb, C, HW), lambda n: (n, 0, 0)),      # x (lane-dense)
                pl.BlockSpec((Cr, C), lambda n: (0, 0)),             # fc1 weight
                pl.BlockSpec((C, Cr), lambda n: (0, 0)),             # fc2 weight
            ],
            out_specs=pl.BlockSpec((nb, C, HW), lambda n: (n, 0, 0)),
        ),
        compiler_params=pltpu.CompilerParams(
            dimension_semantics=("parallel",),
            vmem_limit_bytes=vmem_limit),
    )(wsp_flat, x_flat, w_fc1, w_fc2)

    return out_flat.reshape(N, C, H, W)


def cbam_ref(x, w_fc1, w_fc2, w_spatial):
    """Pure-JAX reference mirroring the PyTorch module."""
    avg = jnp.mean(x, axis=(2, 3), keepdims=True)
    mx = jnp.max(x, axis=(2, 3), keepdims=True)

    def mlp(p):  # 1x1 convs == matmuls over the channel axis
        h = jnp.maximum(jnp.einsum('rc,ncij->nrij', w_fc1, p), 0.0)
        return jnp.einsum('cr,nrij->ncij', w_fc2, h)

    ca = jax.nn.sigmoid(mlp(avg) + mlp(mx))
    x = x * ca

    mean_c = jnp.mean(x, axis=1, keepdims=True)
    max_c = jnp.max(x, axis=1, keepdims=True)
    feat = jnp.concatenate([mean_c, max_c], axis=1)
    conv = jax.lax.conv_general_dilated(
        feat, w_spatial, window_strides=(1, 1), padding=[(1, 1), (1, 1)],
        dimension_numbers=('NCHW', 'OIHW', 'NCHW'))
    sa = jax.nn.sigmoid(conv)
    return x * sa


if __name__ == "__main__":
    N, C, H, W = 2, 16, 16, 16
    ratio = 8
    Cr = C // ratio

    key = jax.random.PRNGKey(0)
    kx, k1, k2, k3 = jax.random.split(key, 4)

    x = jax.random.normal(kx, (N, C, H, W), dtype=jnp.float32)
    w_fc1 = 0.3 * jax.random.normal(k1, (Cr, C), dtype=jnp.float32)       # Conv2d(C, Cr, 1)
    w_fc2 = 0.3 * jax.random.normal(k2, (C, Cr), dtype=jnp.float32)       # Conv2d(Cr, C, 1)
    w_spatial = 0.3 * jax.random.normal(k3, (1, 2, 3, 3), dtype=jnp.float32)  # Conv2d(2, 1, 3)

    out = cbam_block(x, w_fc1, w_fc2, w_spatial)
    out = jax.block_until_ready(out)

    ref = cbam_ref(x, w_fc1, w_fc2, w_spatial)
    assert out.shape == (N, C, H, W)
    assert jnp.allclose(out, ref, rtol=1e-5, atol=1e-5), "mismatch vs reference"

    print("KERNEL_OK")
</pallas_src>

<mosaic_0001>
module attributes {stable_mosaic.version = 11 : i64} {
  func.func @_cbam_kernel(%arg0: i32, %arg1: memref<18xf32, #tpu.memory_space<smem>>, %arg2: memref<2x16x256xf32, #tpu.memory_space<vmem>>, %arg3: memref<2x16xf32, #tpu.memory_space<vmem>>, %arg4: memref<16x2xf32, #tpu.memory_space<vmem>>, %arg5: memref<2x16x256xf32, #tpu.memory_space<vmem>>) attributes {dimension_semantics = [#tpu.dimension_semantics<parallel>], iteration_bounds = array<i64: 1>, scalar_prefetch = 0 : i64, scratch_operands = 0 : i64, tpu.core_type = #tpu.core_type<tc>, window_params = [{transform_indices = @transform_0, window_bounds = array<i64: 18>}, {transform_indices = @transform_1, window_bounds = array<i64: 2, 16, 256>}, {pipeline_mode = #tpu.pipeline_mode<synchronous>, transform_indices = @transform_2, window_bounds = array<i64: 2, 16>}, {pipeline_mode = #tpu.pipeline_mode<synchronous>, transform_indices = @transform_3, window_bounds = array<i64: 16, 2>}, {transform_indices = @transform_4, window_bounds = array<i64: 2, 16, 256>}]} {
    %c0 = arith.constant 0 : index
    %c0_0 = arith.constant 0 : index
    %c0_1 = arith.constant 0 : index
    %0 = vector.load %arg2[%c0, %c0_0, %c0_1] : memref<2x16x256xf32, #tpu.memory_space<vmem>>, vector<2x16x256xf32>
    %cst = arith.constant dense<0.000000e+00> : vector<2x16xf32>
    %1 = vector.multi_reduction <add>, %0, %cst [2] : vector<2x16x256xf32> to vector<2x16xf32>
    %cst_2 = arith.constant 2.560000e+02 : f32
    %2 = vector.broadcast %cst_2 : f32 to vector<2x16xf32>
    %3 = arith.divf %1, %2 : vector<2x16xf32>
    %cst_3 = arith.constant dense<0xFF800000> : vector<2x16xf32>
    %4 = vector.multi_reduction <maximumf>, %0, %cst_3 [2] : vector<2x16x256xf32> to vector<2x16xf32>
    %5 = tpu.concatenate %3, %4 in 0 : vector<2x16xf32>, vector<2x16xf32> -> vector<4x16xf32>
    %c0_4 = arith.constant 0 : index
    %c0_5 = arith.constant 0 : index
    %6 = vector.load %arg3[%c0_4, %c0_5] : memref<2x16xf32, #tpu.memory_space<vmem>>, vector<2x16xf32>
    %c0_6 = arith.constant 0 : index
    %c0_7 = arith.constant 0 : index
    %7 = vector.load %arg4[%c0_6, %c0_7] : memref<16x2xf32, #tpu.memory_space<vmem>>, vector<16x2xf32>
    %cst_8 = arith.constant dense<0.000000e+00> : vector<4x2xf32>
    %8 = tpu.matmul %5, %6, %cst_8 {dimension_numbers = #tpu.dot_dimension_numbers<[1], [1], [0], [0], [0, 0, 1, 0], [], []>} : vector<4x16xf32>, vector<2x16xf32>, vector<4x2xf32> -> vector<4x2xf32>
    %cst_9 = arith.constant 0.000000e+00 : f32
    %9 = vector.broadcast %cst_9 : f32 to vector<4x2xf32>
    %10 = arith.maximumf %8, %9 : vector<4x2xf32>
    %cst_10 = arith.constant dense<0.000000e+00> : vector<4x16xf32>
    %11 = tpu.matmul %10, %7, %cst_10 {dimension_numbers = #tpu.dot_dimension_numbers<[1], [1], [0], [0], [0, 0, 1, 0], [], []>} : vector<4x2xf32>, vector<16x2xf32>, vector<4x16xf32> -> vector<4x16xf32>
    %12 = vector.extract_strided_slice %11 {offsets = [0, 0], sizes = [2, 16], strides = [1, 1]} : vector<4x16xf32> to vector<2x16xf32>
    %13 = vector.extract_strided_slice %11 {offsets = [2, 0], sizes = [2, 16], strides = [1, 1]} : vector<4x16xf32> to vector<2x16xf32>
    %14 = arith.addf %12, %13 : vector<2x16xf32>
    %15 = arith.negf %14 : vector<2x16xf32>
    %16 = math.exp %15 : vector<2x16xf32>
    %cst_11 = arith.constant 1.000000e+00 : f32
    %17 = vector.broadcast %cst_11 : f32 to vector<2x16xf32>
    %18 = arith.addf %17, %16 : vector<2x16xf32>
    %19 = arith.divf %17, %18 : vector<2x16xf32>
    %20 = vector.shape_cast %19 : vector<2x16xf32> to vector<2x16x1xf32>
    %21 = vector.broadcast %20 : vector<2x16x1xf32> to vector<2x16x256xf32>
    %22 = arith.mulf %0, %21 : vector<2x16x256xf32>
    %cst_12 = arith.constant dense<0.000000e+00> : vector<2x256xf32>
    %23 = vector.multi_reduction <add>, %22, %cst_12 [1] : vector<2x16x256xf32> to vector<2x256xf32>
    %cst_13 = arith.constant 1.600000e+01 : f32
    %24 = vector.broadcast %cst_13 : f32 to vector<2x256xf32>
    %25 = arith.divf %23, %24 : vector<2x256xf32>
    %cst_14 = arith.constant dense<0xFF800000> : vector<2x256xf32>
    %26 = vector.multi_reduction <maximumf>, %22, %cst_14 [1] : vector<2x16x256xf32> to vector<2x256xf32>
    %27 = tpu.iota {dimensions = array<i32: 1>} : vector<2x256xi32>
    %c16_i32 = arith.constant 16 : i32
    %c0_i32 = arith.constant 0 : i32
    %28 = arith.cmpi eq, %c16_i32, %c0_i32 : i32
    %c1_i32 = arith.constant 1 : i32
    %29 = arith.select %28, %c1_i32, %c16_i32 : i32
    %30 = vector.broadcast %29 : i32 to vector<2x256xi32>
    %31 = arith.remsi %27, %30 : vector<2x256xi32>
    %c0_i32_15 = arith.constant 0 : i32
    %32 = vector.broadcast %c0_i32_15 : i32 to vector<2x256xi32>
    %33 = arith.cmpi ne, %31, %32 : vector<2x256xi32>
    %c0_i32_16 = arith.constant 0 : i32
    %34 = vector.broadcast %c0_i32_16 : i32 to vector<2x256xi32>
    %35 = arith.cmpi slt, %31, %34 : vector<2x256xi32>
    %c0_i32_17 = arith.constant 0 : i32
    %36 = arith.cmpi slt, %29, %c0_i32_17 : i32
    %37 = vector.broadcast %36 : i1 to vector<2x256xi1>
    %38 = vector.broadcast %37 : vector<2x256xi1> to vector<2x256xi1>
    %39 = arith.xori %35, %38 : vector<2x256xi1>
    %40 = arith.andi %39, %33 : vector<2x256xi1>
    %41 = vector.broadcast %29 : i32 to vector<2x256xi32>
    %42 = arith.addi %31, %41 : vector<2x256xi32>
    %43 = arith.select %40, %42, %31 : vector<2x256xi1>, vector<2x256xi32>
    %c16_i32_18 = arith.constant 16 : i32
    %44 = vector.broadcast %c16_i32_18 : i32 to vector<2x256xi32>
    %45 = arith.cmpi sge, %27, %44 : vector<2x256xi32>
    %c240_i32 = arith.constant 240 : i32
    %46 = vector.broadcast %c240_i32 : i32 to vector<2x256xi32>
    %47 = arith.cmpi slt, %27, %46 : vector<2x256xi32>
    %c1_i32_19 = arith.constant 1 : i32
    %48 = vector.broadcast %c1_i32_19 : i32 to vector<2x256xi32>
    %49 = arith.cmpi sge, %43, %48 : vector<2x256xi32>
    %c15_i32 = arith.constant 15 : i32
    %50 = vector.broadcast %c15_i32 : i32 to vector<2x256xi32>
    %51 = arith.cmpi slt, %43, %50 : vector<2x256xi32>
    %cst_20 = arith.constant 0.000000e+00 : f32
    %52 = vector.broadcast %cst_20 : f32 to vector<2x256xf32>
    %c17_i32 = arith.constant 17 : i32
    %53 = tpu.dynamic_rotate %25 by %c17_i32 dim 1 : vector<2x256xf32>, i32 -> vector<2x256xf32>
    %54 = arith.andi %45, %49 : vector<2x256xi1>
    %cst_21 = arith.constant 0.000000e+00 : f32
    %55 = vector.broadcast %cst_21 : f32 to vector<2x256xf32>
    %56 = arith.select %54, %53, %55 : vector<2x256xi1>, vector<2x256xf32>
    %c0_22 = arith.constant 0 : index
    %57 = memref.load %arg1[%c0_22] : memref<18xf32, #tpu.memory_space<smem>>
    %58 = vector.broadcast %57 : f32 to vector<2x256xf32>
    %59 = arith.mulf %58, %56 : vector<2x256xf32>
    %60 = arith.addf %52, %59 : vector<2x256xf32>
    %c16_i32_23 = arith.constant 16 : i32
    %61 = tpu.dynamic_rotate %25 by %c16_i32_23 dim 1 : vector<2x256xf32>, i32 -> vector<2x256xf32>
    %cst_24 = arith.constant 0.000000e+00 : f32
    %62 = vector.broadcast %cst_24 : f32 to vector<2x256xf32>
    %63 = arith.select %45, %61, %62 : vector<2x256xi1>, vector<2x256xf32>
    %c1 = arith.constant 1 : index
    %64 = memref.load %arg1[%c1] : memref<18xf32, #tpu.memory_space<smem>>
    %65 = vector.broadcast %64 : f32 to vector<2x256xf32>
    %66 = arith.mulf %65, %63 : vector<2x256xf32>
    %67 = arith.addf %60, %66 : vector<2x256xf32>
    %c15_i32_25 = arith.constant 15 : i32
    %68 = tpu.dynamic_rotate %25 by %c15_i32_25 dim 1 : vector<2x256xf32>, i32 -> vector<2x256xf32>
    %69 = arith.andi %45, %51 : vector<2x256xi1>
    %cst_26 = arith.constant 0.000000e+00 : f32
    %70 = vector.broadcast %cst_26 : f32 to vector<2x256xf32>
    %71 = arith.select %69, %68, %70 : vector<2x256xi1>, vector<2x256xf32>
    %c2 = arith.constant 2 : index
    %72 = memref.load %arg1[%c2] : memref<18xf32, #tpu.memory_space<smem>>
    %73 = vector.broadcast %72 : f32 to vector<2x256xf32>
    %74 = arith.mulf %73, %71 : vector<2x256xf32>
    %75 = arith.addf %67, %74 : vector<2x256xf32>
    %c1_i32_27 = arith.constant 1 : i32
    %76 = tpu.dynamic_rotate %25 by %c1_i32_27 dim 1 : vector<2x256xf32>, i32 -> vector<2x256xf32>
    %cst_28 = arith.constant 0.000000e+00 : f32
    %77 = vector.broadcast %cst_28 : f32 to vector<2x256xf32>
    %78 = arith.select %49, %76, %77 : vector<2x256xi1>, vector<2x256xf32>
    %c3 = arith.constant 3 : index
    %79 = memref.load %arg1[%c3] : memref<18xf32, #tpu.memory_space<smem>>
    %80 = vector.broadcast %79 : f32 to vector<2x256xf32>
    %81 = arith.mulf %80, %78 : vector<2x256xf32>
    %82 = arith.addf %75, %81 : vector<2x256xf32>
    %c4 = arith.constant 4 : index
    %83 = memref.load %arg1[%c4] : memref<18xf32, #tpu.memory_space<smem>>
    %84 = vector.broadcast %83 : f32 to vector<2x256xf32>
    %85 = arith.mulf %84, %25 : vector<2x256xf32>
    %86 = arith.addf %82, %85 : vector<2x256xf32>
    %c255_i32 = arith.constant 255 : i32
    %87 = tpu.dynamic_rotate %25 by %c255_i32 dim 1 : vector<2x256xf32>, i32 -> vector<2x256xf32>
    %cst_29 = arith.constant 0.000000e+00 : f32
    %88 = vector.broadcast %cst_29 : f32 to vector<2x256xf32>
    %89 = arith.select %51, %87, %88 : vector<2x256xi1>, vector<2x256xf32>
    %c5 = arith.constant 5 : index
    %90 = memref.load %arg1[%c5] : memref<18xf32, #tpu.memory_space<smem>>
    %91 = vector.broadcast %90 : f32 to vector<2x256xf32>
    %92 = arith.mulf %91, %89 : vector<2x256xf32>
    %93 = arith.addf %86, %92 : vector<2x256xf32>
    %c241_i32 = arith.constant 241 : i32
    %94 = tpu.dynamic_rotate %25 by %c241_i32 dim 1 : vector<2x256xf32>, i32 -> vector<2x256xf32>
    %95 = arith.andi %47, %49 : vector<2x256xi1>
    %cst_30 = arith.constant 0.000000e+00 : f32
    %96 = vector.broadcast %cst_30 : f32 to vector<2x256xf32>
    %97 = arith.select %95, %94, %96 : vector<2x256xi1>, vector<2x256xf32>
    %c6 = arith.constant 6 : index
    %98 = memref.load %arg1[%c6] : memref<18xf32, #tpu.memory_space<smem>>
    %99 = vector.broadcast %98 : f32 to vector<2x256xf32>
    %100 = arith.mulf %99, %97 : vector<2x256xf32>
    %101 = arith.addf %93, %100 : vector<2x256xf32>
    %c240_i32_31 = arith.constant 240 : i32
    %102 = tpu.dynamic_rotate %25 by %c240_i32_31 dim 1 : vector<2x256xf32>, i32 -> vector<2x256xf32>
    %cst_32 = arith.constant 0.000000e+00 : f32
    %103 = vector.broadcast %cst_32 : f32 to vector<2x256xf32>
    %104 = arith.select %47, %102, %103 : vector<2x256xi1>, vector<2x256xf32>
    %c7 = arith.constant 7 : index
    %105 = memref.load %arg1[%c7] : memref<18xf32, #tpu.memory_space<smem>>
    %106 = vector.broadcast %105 : f32 to vector<2x256xf32>
    %107 = arith.mulf %106, %104 : vector<2x256xf32>
    %108 = arith.addf %101, %107 : vector<2x256xf32>
    %c239_i32 = arith.constant 239 : i32
    %109 = tpu.dynamic_rotate %25 by %c239_i32 dim 1 : vector<2x256xf32>, i32 -> vector<2x256xf32>
    %110 = arith.andi %47, %51 : vector<2x256xi1>
    %cst_33 = arith.constant 0.000000e+00 : f32
    %111 = vector.broadcast %cst_33 : f32 to vector<2x256xf32>
    %112 = arith.select %110, %109, %111 : vector<2x256xi1>, vector<2x256xf32>
    %c8 = arith.constant 8 : index
    %113 = memref.load %arg1[%c8] : memref<18xf32, #tpu.memory_space<smem>>
    %114 = vector.broadcast %113 : f32 to vector<2x256xf32>
    %115 = arith.mulf %114, %112 : vector<2x256xf32>
    %116 = arith.addf %108, %115 : vector<2x256xf32>
    %c17_i32_34 = arith.constant 17 : i32
    %117 = tpu.dynamic_rotate %26 by %c17_i32_34 dim 1 : vector<2x256xf32>, i32 -> vector<2x256xf32>
    %118 = arith.andi %45, %49 : vector<2x256xi1>
    %cst_35 = arith.constant 0.000000e+00 : f32
    %119 = vector.broadcast %cst_35 : f32 to vector<2x256xf32>
    %120 = arith.select %118, %117, %119 : vector<2x256xi1>, vector<2x256xf32>
    %c9 = arith.constant 9 : index
    %121 = memref.load %arg1[%c9] : memref<18xf32, #tpu.memory_space<smem>>
    %122 = vector.broadcast %121 : f32 to vector<2x256xf32>
    %123 = arith.mulf %122, %120 : vector<2x256xf32>
    %124 = arith.addf %116, %123 : vector<2x256xf32>
    %c16_i32_36 = arith.constant 16 : i32
    %125 = tpu.dynamic_rotate %26 by %c16_i32_36 dim 1 : vector<2x256xf32>, i32 -> vector<2x256xf32>
    %cst_37 = arith.constant 0.000000e+00 : f32
    %126 = vector.broadcast %cst_37 : f32 to vector<2x256xf32>
    %127 = arith.select %45, %125, %126 : vector<2x256xi1>, vector<2x256xf32>
    %c10 = arith.constant 10 : index
    %128 = memref.load %arg1[%c10] : memref<18xf32, #tpu.memory_space<smem>>
    %129 = vector.broadcast %128 : f32 to vector<2x256xf32>
    %130 = arith.mulf %129, %127 : vector<2x256xf32>
    %131 = arith.addf %124, %130 : vector<2x256xf32>
    %c15_i32_38 = arith.constant 15 : i32
    %132 = tpu.dynamic_rotate %26 by %c15_i32_38 dim 1 : vector<2x256xf32>, i32 -> vector<2x256xf32>
    %133 = arith.andi %45, %51 : vector<2x256xi1>
    %cst_39 = arith.constant 0.000000e+00 : f32
    %134 = vector.broadcast %cst_39 : f32 to vector<2x256xf32>
    %135 = arith.select %133, %132, %134 : vector<2x256xi1>, vector<2x256xf32>
    %c11 = arith.constant 11 : index
    %136 = memref.load %arg1[%c11] : memref<18xf32, #tpu.memory_space<smem>>
    %137 = vector.broadcast %136 : f32 to vector<2x256xf32>
    %138 = arith.mulf %137, %135 : vector<2x256xf32>
    %139 = arith.addf %131, %138 : vector<2x256xf32>
    %c1_i32_40 = arith.constant 1 : i32
    %140 = tpu.dynamic_rotate %26 by %c1_i32_40 dim 1 : vector<2x256xf32>, i32 -> vector<2x256xf32>
    %cst_41 = arith.constant 0.000000e+00 : f32
    %141 = vector.broadcast %cst_41 : f32 to vector<2x256xf32>
    %142 = arith.select %49, %140, %141 : vector<2x256xi1>, vector<2x256xf32>
    %c12 = arith.constant 12 : index
    %143 = memref.load %arg1[%c12] : memref<18xf32, #tpu.memory_space<smem>>
    %144 = vector.broadcast %143 : f32 to vector<2x256xf32>
    %145 = arith.mulf %144, %142 : vector<2x256xf32>
    %146 = arith.addf %139, %145 : vector<2x256xf32>
    %c13 = arith.constant 13 : index
    %147 = memref.load %arg1[%c13] : memref<18xf32, #tpu.memory_space<smem>>
    %148 = vector.broadcast %147 : f32 to vector<2x256xf32>
    %149 = arith.mulf %148, %26 : vector<2x256xf32>
    %150 = arith.addf %146, %149 : vector<2x256xf32>
    %c255_i32_42 = arith.constant 255 : i32
    %151 = tpu.dynamic_rotate %26 by %c255_i32_42 dim 1 : vector<2x256xf32>, i32 -> vector<2x256xf32>
    %cst_43 = arith.constant 0.000000e+00 : f32
    %152 = vector.broadcast %cst_43 : f32 to vector<2x256xf32>
    %153 = arith.select %51, %151, %152 : vector<2x256xi1>, vector<2x256xf32>
    %c14 = arith.constant 14 : index
    %154 = memref.load %arg1[%c14] : memref<18xf32, #tpu.memory_space<smem>>
    %155 = vector.broadcast %154 : f32 to vector<2x256xf32>
    %156 = arith.mulf %155, %153 : vector<2x256xf32>
    %157 = arith.addf %150, %156 : vector<2x256xf32>
    %c241_i32_44 = arith.constant 241 : i32
    %158 = tpu.dynamic_rotate %26 by %c241_i32_44 dim 1 : vector<2x256xf32>, i32 -> vector<2x256xf32>
    %159 = arith.andi %47, %49 : vector<2x256xi1>
    %cst_45 = arith.constant 0.000000e+00 : f32
    %160 = vector.broadcast %cst_45 : f32 to vector<2x256xf32>
    %161 = arith.select %159, %158, %160 : vector<2x256xi1>, vector<2x256xf32>
    %c15 = arith.constant 15 : index
    %162 = memref.load %arg1[%c15] : memref<18xf32, #tpu.memory_space<smem>>
    %163 = vector.broadcast %162 : f32 to vector<2x256xf32>
    %164 = arith.mulf %163, %161 : vector<2x256xf32>
    %165 = arith.addf %157, %164 : vector<2x256xf32>
    %c240_i32_46 = arith.constant 240 : i32
    %166 = tpu.dynamic_rotate %26 by %c240_i32_46 dim 1 : vector<2x256xf32>, i32 -> vector<2x256xf32>
    %cst_47 = arith.constant 0.000000e+00 : f32
    %167 = vector.broadcast %cst_47 : f32 to vector<2x256xf32>
    %168 = arith.select %47, %166, %167 : vector<2x256xi1>, vector<2x256xf32>
    %c16 = arith.constant 16 : index
    %169 = memref.load %arg1[%c16] : memref<18xf32, #tpu.memory_space<smem>>
    %170 = vector.broadcast %169 : f32 to vector<2x256xf32>
    %171 = arith.mulf %170, %168 : vector<2x256xf32>
    %172 = arith.addf %165, %171 : vector<2x256xf32>
    %c239_i32_48 = arith.constant 239 : i32
    %173 = tpu.dynamic_rotate %26 by %c239_i32_48 dim 1 : vector<2x256xf32>, i32 -> vector<2x256xf32>
    %174 = arith.andi %47, %51 : vector<2x256xi1>
    %cst_49 = arith.constant 0.000000e+00 : f32
    %175 = vector.broadcast %cst_49 : f32 to vector<2x256xf32>
    %176 = arith.select %174, %173, %175 : vector<2x256xi1>, vector<2x256xf32>
    %c17 = arith.constant 17 : index
    %177 = memref.load %arg1[%c17] : memref<18xf32, #tpu.memory_space<smem>>
    %178 = vector.broadcast %177 : f32 to vector<2x256xf32>
    %179 = arith.mulf %178, %176 : vector<2x256xf32>
    %180 = arith.addf %172, %179 : vector<2x256xf32>
    %181 = arith.negf %180 : vector<2x256xf32>
    %182 = math.exp %181 : vector<2x256xf32>
    %cst_50 = arith.constant 1.000000e+00 : f32
    %183 = vector.broadcast %cst_50 : f32 to vector<2x256xf32>
    %184 = arith.addf %183, %182 : vector<2x256xf32>
    %185 = arith.divf %183, %184 : vector<2x256xf32>
    %186 = vector.shape_cast %185 : vector<2x256xf32> to vector<2x1x256xf32>
    %187 = vector.broadcast %186 : vector<2x1x256xf32> to vector<2x16x256xf32>
    %188 = arith.mulf %22, %187 : vector<2x16x256xf32>
    %c0_51 = arith.constant 0 : index
    %c0_52 = arith.constant 0 : index
    %c0_53 = arith.constant 0 : index
    %189 = vector.load %arg5[%c0_51, %c0_52, %c0_53] : memref<2x16x256xf32, #tpu.memory_space<vmem>>, vector<2x16x256xf32>
    tpu.vector_store %arg5[%c0_51, %c0_52, %c0_53], %188 {strides = array<i32>} : memref<2x16x256xf32, #tpu.memory_space<vmem>>, vector<2x16x256xf32>,
    return
  }
  func.func @transform_0(%arg0: i32) -> i32 {
    %c0_i32 = arith.constant 0 : i32
    %c0_i32_0 = arith.constant 0 : i32
    return %c0_i32 : i32
  }
  func.func @transform_1(%arg0: i32) -> (i32, i32, i32) {
    %c0_i32 = arith.constant 0 : i32
    %c0_i32_0 = arith.constant 0 : i32
    %c0_i32_1 = arith.constant 0 : i32
    return %arg0, %c0_i32, %c0_i32_0 : i32, i32, i32
  }
  func.func @transform_2(%arg0: i32) -> (i32, i32) {
    %c0_i32 = arith.constant 0 : i32
    %c0_i32_0 = arith.constant 0 : i32
    %c0_i32_1 = arith.constant 0 : i32
    return %c0_i32, %c0_i32_0 : i32, i32
  }
  func.func @transform_3(%arg0: i32) -> (i32, i32) {
    %c0_i32 = arith.constant 0 : i32
    %c0_i32_0 = arith.constant 0 : i32
    %c0_i32_1 = arith.constant 0 : i32
    return %c0_i32, %c0_i32_0 : i32, i32
  }
  func.func @transform_4(%arg0: i32) -> (i32, i32, i32) {
    %c0_i32 = arith.constant 0 : i32
    %c0_i32_0 = arith.constant 0 : i32
    %c0_i32_1 = arith.constant 0 : i32
    return %arg0, %c0_i32, %c0_i32_0 : i32, i32, i32
  }
}

</mosaic_0001>

<llo_original>
// kernel: tpu_custom_call.1
$region0: #{tpu_custom_call.1}
  #allocation0 [shape = 'u32[]', space=smem, size = 0x4, offset = 0x4, fixed_abs, tag = 'smem constant byte address 0x4 - core index']
  #allocation1 [shape = 'u32[144,128]{1,0:T(1,128)}', space=vmem, size = 0x12000, scoped, tag = 'internal scratch']
  %s0 = inlined_call_operand.vmem [shape: f32[18], index: 0, kind: input, shape index: {}]
  %s1 = inlined_call_operand.hbm [shape: f32[2,16,256], index: 1, kind: input, shape index: {}]
  %s2 = inlined_call_operand.vmem [shape: f32[2,16], index: 2, kind: input, shape index: {}]
  %s3 = inlined_call_operand.vmem [shape: f32[16,2], index: 3, kind: input, shape index: {}]
  %s4 = inlined_call_operand.hbm [shape: f32[2,16,256], index: 4, kind: output, shape index: {}]
  %s5 = sld [smem:[#allocation0]]
  $region34: #{tpu_custom_call.1} parent=0
    _
  %s7 = ssub.s32 1, %s5
  %s8 = scalar_select 0, %s7, %s5
  $region1: #{tpu_custom_call.1} parent=0
    #allocation2 [shape = 'u8[512]{0}', space=smem, size = 0x200, scoped, tag = 'input window, operand 0, single buffered']
    #allocation3 [shape = 's32[1]{0}', space=sflag, size = 0x4, scoped, tag = 'scoped memory for tpu_custom_call.1']
    #allocation4 [shape = 's32[1]{0}', space=sflag, size = 0x4, scoped, tag = 'scoped memory for tpu_custom_call.1']
    #allocation5 [shape = 's32[1]{0}', space=sflag, size = 0x4, scoped, tag = 'scoped memory for tpu_custom_call.1']
    #allocation6 [shape = 'u8[32768]{0}', space=vmem, size = 0x8000, scoped, tag = 'input window, operand 1, single buffered']
    #allocation7 [shape = 'u8[32768]{0}', space=vmem, size = 0x8000, scoped, tag = 'output window, operand 0, single buffered']
    %9 = vsyncpa [#allocation5], 0
    %10 = vsyncpa [#allocation3], 0
    %11 = vsyncpa [#allocation4], 0
    // Predicated region
    $region2: #{tpu_custom_call.1} parent=1 // pred_check
      _
    $region3: #{tpu_custom_call.1} parent=1 // pred_check_branch
      %13 = sbr.rel (0) target = $region5
    $region4: #{tpu_custom_call.1} parent=1 // pred_region
      %s15 = ssub.s32 16, 16
      %16 = vsyncadd [#allocation5], %s15
      %s18 = sshll.u32 %s0, 4
      %s19 = int_to_ptr.vmem [resolvable:$true] %s18
      %21 = dma.vmem_to_smem %s19, 16, [#allocation2], [#allocation5]
    $region5: #{tpu_custom_call.1} parent=1 // pred_fallthru
      _
    // Predicated region
    $region6: #{tpu_custom_call.1} parent=1 // pred_check
      _
    $region7: #{tpu_custom_call.1} parent=1 // pred_check_branch
      %23 = sbr.rel (0) target = $region9
    $region8: #{tpu_custom_call.1} parent=1 // pred_region
      %s25 = ssub.s32 1024, 1024
      %26 = vsyncadd [#allocation3], %s25
      %s27 = sshll.u32 [#allocation6], 4
      %s28 = int_to_ptr.vmem [resolvable:$true] %s27
      %33 = dma.hbm_to_vmem [thread:$0]  %s1, 1024, %s28, [#allocation3], 256, 256, 16
    $region9: #{tpu_custom_call.1} parent=1 // pred_fallthru
      _
    // Predicated region
    $region10: #{tpu_custom_call.1} parent=1 // pred_check
      _
    $region11: #{tpu_custom_call.1} parent=1 // pred_check_branch
      %35 = sbr.rel (0) target = $region13
    $region12: #{tpu_custom_call.1} parent=1 // pred_region
      _
    $region13: #{tpu_custom_call.1} parent=1 // pred_fallthru
      _
    // Predicated region
    $region14: #{tpu_custom_call.1} parent=1 // pred_check
      _
    $region15: #{tpu_custom_call.1} parent=1 // pred_check_branch
      %37 = sbr.rel (0) target = $region17
    $region16: #{tpu_custom_call.1} parent=1 // pred_region
      _
    $region17: #{tpu_custom_call.1} parent=1 // pred_fallthru
      _
    // Predicated region
    $region18: #{tpu_custom_call.1} parent=1 // pred_check
      _
    $region19: #{tpu_custom_call.1} parent=1 // pred_check_branch
      %39 = sbr.rel (0) target = $region21
    $region20: #{tpu_custom_call.1} parent=1 // pred_region
      %40 = dma.done [#allocation5], 16
    $region21: #{tpu_custom_call.1} parent=1 // pred_fallthru
      _
    // Predicated region
    $region22: #{tpu_custom_call.1} parent=1 // pred_check
      _
    $region23: #{tpu_custom_call.1} parent=1 // pred_check_branch
      %42 = sbr.rel (0) target = $region25
    $region24: #{tpu_custom_call.1} parent=1 // pred_region
      %43 = dma.done [#allocation3], 1024
    $region25: #{tpu_custom_call.1} parent=1 // pred_fallthru
      _
    %44 = sfence
    %v45 = vld [vmem:[#allocation6] sm:$0xff]
    %v46 = vld [vmem:[#allocation6 + $0x8] sm:$0xff]
    %v47 = vld [vmem:[#allocation6 + $0x10] sm:$0xff]
    %v48 = vld [vmem:[#allocation6 + $0x18] sm:$0xff]
    %v49 = vld [vmem:[#allocation6 + $0x20] sm:$0xff]
    %v50 = vld [vmem:[#allocation6 + $0x28] sm:$0xff]
    %v51 = vld [vmem:[#allocation6 + $0x30] sm:$0xff]
    %v52 = vld [vmem:[#allocation6 + $0x38] sm:$0xff]
    %v53 = vadd.f32 %v45, %v46
    %54 = vadd.xlane.f32.xlu0 %v53
    %v55 = vpop.xlane.xlu0 %54
    %v56 = vadd.f32 %v47, %v48
    %57 = vadd.xlane.f32.xlu0 %v56
    %v58 = vpop.xlane.xlu0 %57
    %v59 = vadd.f32 %v49, %v50
    %60 = vadd.xlane.f32.xlu0 %v59
    %v61 = vpop.xlane.xlu0 %60
    %v62 = vadd.f32 %v51, %v52
    %63 = vadd.xlane.f32.xlu0 %v62
    %v64 = vpop.xlane.xlu0 %63
    %v65 = vrcp.pop 256.0
    %v66 = vmul.f32 %v55, %v65
    %v67 = vmul.f32 %v58, %v65
    %v68 = vmul.f32 %v61, %v65
    %v69 = vmul.f32 %v64, %v65
    %v70 = vmax.f32 %v45, %v46
    %71 = vmax.xlane.f32.xlu0 %v70
    %v72 = vpop.xlane.xlu0 %71
    %v73 = vmax.f32 %v47, %v48
    %74 = vmax.xlane.f32.xlu0 %v73
    %v75 = vpop.xlane.xlu0 %74
    %v76 = vmax.f32 %v49, %v50
    %77 = vmax.xlane.f32.xlu0 %v76
    %v78 = vpop.xlane.xlu0 %77
    %v79 = vmax.f32 %v51, %v52
    %80 = vmax.xlane.f32.xlu0 %v79
    %v81 = vpop.xlane.xlu0 %80
    %v86 = vlaneseq
    %v87 = vand.u32 %v86, 127
    %v88 = vlaneseq
    %v89 = vshrl.u32 %v88, 7
    %v90 = vsub.s32 %v87, %v89
    %v91 = vrot.slane %v66, %v90
    %v92 = vadd.s32 %v87, 4294967288
    %v93 = vlaneseq
    %v94 = vshrl.u32 %v93, 7
    %v95 = vsub.s32 %v92, %v94
    %v96 = vrot.slane %v67, %v95
    %vm97 = vcmask 130112
    %v98 = vsel %vm97, %v96, %v91
    %v99 = vlaneseq
    %v100 = vshrl.u32 %v99, 7
    %v101 = vsub.s32 %v87, %v100
    %v102 = vrot.slane %v68, %v101
    %v103 = vlaneseq
    %v104 = vshrl.u32 %v103, 7
    %v105 = vsub.s32 %v92, %v104
    %v106 = vrot.slane %v69, %v105
    %v107 = vsel %vm97, %v106, %v102
    %vm108 = vcmask 1041409
    %v109 = vsel %vm108, %v107, %v98
    %v115 = vlaneseq
    %v116 = vshrl.u32 %v115, 7
    %v117 = vsub.s32 %v87, %v116
    %v118 = vrot.slane %v72, %v117
    %v119 = vlaneseq
    %v120 = vshrl.u32 %v119, 7
    %v121 = vsub.s32 %v92, %v120
    %v122 = vrot.slane %v75, %v121
    %v123 = vsel %vm97, %v122, %v118
    %v124 = vlaneseq
    %v125 = vshrl.u32 %v124, 7
    %v126 = vsub.s32 %v87, %v125
    %v127 = vrot.slane %v78, %v126
    %v128 = vlaneseq
    %v129 = vshrl.u32 %v128, 7
    %v130 = vsub.s32 %v92, %v129
    %v131 = vrot.slane %v81, %v130
    %v132 = vsel %vm97, %v131, %v127
    %vm133 = vcmask 1043459
    %v134 = vsel %vm133, %v132, %v123
    %vm136 = vcmask 1041408
    %v137 = vsel %vm136, %v109, %v134
    %v138 = vld [vmem:[%s2] sm:$0x3]
    %v139 = vld [vmem:[%s3] sm:$0xff]
    %v140 = vld [vmem:[%s3 + $0x8] sm:$0xff]
    %vm141 = vcmask 130048
    %v143 = vsel %vm141, %v137, 0
    %v146 = vsel %vm141, %v138, 0
    %148 = vmatprep.subr.mxu0 0.0
    %149 = vmatpush1.xpose.msra.mxu0 %v146
    %150 = vmatprep.subr.mxu0 0.0
    %151 = vmatpush1.xpose.msra.mxu0 0.0
    %152 = vmatprep.subr.mxu0 0.0
    %153 = vmatpush1.xpose.msra.mxu0 0.0
    %154 = vmatprep.subr.mxu0 0.0
    %155 = vmatpush1.xpose.msra.mxu0 0.0
    %156 = vmatprep.subr.mxu0 0.0
    %157 = vmatpush1.xpose.msra.mxu0 0.0
    %158 = vmatprep.subr.mxu0 0.0
    %159 = vmatpush1.xpose.msra.mxu0 0.0
    %160 = vmatprep.subr.mxu0 0.0
    %161 = vmatpush1.xpose.msra.mxu0 0.0
    %162 = vmatprep.subr.mxu0 0.0
    %163 = vmatpush1.xpose.msra.mxu0 0.0
    %164 = vmatprep.subr.mxu0 0.0
    %165 = vmatpush1.xpose.msra.mxu0 0.0
    %166 = vmatprep.subr.mxu0 0.0
    %167 = vmatpush1.xpose.msra.mxu0 0.0
    %168 = vmatprep.subr.mxu0 0.0
    %169 = vmatpush1.xpose.msra.mxu0 0.0
    %170 = vmatprep.subr.mxu0 0.0
    %171 = vmatpush1.xpose.msra.mxu0 0.0
    %172 = vmatprep.subr.mxu0 0.0
    %173 = vmatpush1.xpose.msra.mxu0 0.0
    %174 = vmatprep.subr.mxu0 0.0
    %175 = vmatpush1.xpose.msra.mxu0 0.0
    %176 = vmatprep.subr.mxu0 0.0
    %177 = vmatpush1.xpose.msra.mxu0 0.0
    %178 = vmatprep.subr.mxu0 0.0
    %179 = vmatpush1.xpose.msra.mxu0 0.0
    %180 = vmatprep.subr.mxu0 0.0
    %181 = vmatpush1.xpose.msra.mxu0 0.0
    %182 = vmatprep.subr.mxu0 0.0
    %183 = vmatpush1.xpose.msra.mxu0 0.0
    %184 = vmatprep.subr.mxu0 0.0
    %185 = vmatpush1.xpose.msra.mxu0 0.0
    %186 = vmatprep.subr.mxu0 0.0
    %187 = vmatpush1.xpose.msra.mxu0 0.0
    %188 = vmatprep.subr.mxu0 0.0
    %189 = vmatpush1.xpose.msra.mxu0 0.0
    %190 = vmatprep.subr.mxu0 0.0
    %191 = vmatpush1.xpose.msra.mxu0 0.0
    %192 = vmatprep.subr.mxu0 0.0
    %193 = vmatpush1.xpose.msra.mxu0 0.0
    %194 = vmatprep.subr.mxu0 0.0
    %195 = vmatpush1.xpose.msra.mxu0 0.0
    %196 = vmatprep.subr.mxu0 0.0
    %197 = vmatpush1.xpose.msra.mxu0 0.0
    %198 = vmatprep.subr.mxu0 0.0
    %199 = vmatpush1.xpose.msra.mxu0 0.0
    %200 = vmatprep.subr.mxu0 0.0
    %201 = vmatpush1.xpose.msra.mxu0 0.0
    %202 = vmatprep.subr.mxu0 0.0
    %203 = vmatpush1.xpose.msra.mxu0 0.0
    %204 = vmatprep.subr.mxu0 0.0
    %205 = vmatpush1.xpose.msra.mxu0 0.0
    %206 = vmatprep.subr.mxu0 0.0
    %207 = vmatpush1.xpose.msra.mxu0 0.0
    %208 = vmatprep.subr.mxu0 0.0
    %209 = vmatpush1.xpose.msra.mxu0 0.0
    %210 = vmatprep.subr.mxu0 0.0
    %211 = vmatpush1.xpose.msra.mxu0 0.0
    %212 = vmatprep.mubr.f32.mxu0 0.0
    %213 = vmatmul.mubr.f32.gmra.mrb[0].mxu0 %v143
    %v214 = vpop.f32.mrb[0].mxu0
    %v215 = vadd.f32 0.0, %v214
    %v216 = vpop.f32.mrb[0].mxu0
    %217 = vdwg.mxu0
    %v218 = vmax.f32 %v215, 0.0
    %vm219 = vcmask 15360
    %v221 = vsel %vm219, %v218, 0
    %v224 = vsel %vm219, %v139, 0
    %v227 = vsel %vm219, %v140, 0
    %229 = vmatprep.subr.mxu0 0.0
    %230 = vmatpush1.xpose.msra.mxu0 %v224
    %231 = vmatprep.subr.mxu0 0.0
    %232 = vmatpush1.xpose.msra.mxu0 %v227
    %233 = vmatprep.subr.mxu0 0.0
    %234 = vmatpush1.xpose.msra.mxu0 0.0
    %235 = vmatprep.subr.mxu0 0.0
    %236 = vmatpush1.xpose.msra.mxu0 0.0
    %237 = vmatprep.subr.mxu0 0.0
    %238 = vmatpush1.xpose.msra.mxu0 0.0
    %239 = vmatprep.subr.mxu0 0.0
    %240 = vmatpush1.xpose.msra.mxu0 0.0
    %241 = vmatprep.subr.mxu0 0.0
    %242 = vmatpush1.xpose.msra.mxu0 0.0
    %243 = vmatprep.subr.mxu0 0.0
    %244 = vmatpush1.xpose.msra.mxu0 0.0
    %245 = vmatprep.subr.mxu0 0.0
    %246 = vmatpush1.xpose.msra.mxu0 0.0
    %247 = vmatprep.subr.mxu0 0.0
    %248 = vmatpush1.xpose.msra.mxu0 0.0
    %249 = vmatprep.subr.mxu0 0.0
    %250 = vmatpush1.xpose.msra.mxu0 0.0
    %251 = vmatprep.subr.mxu0 0.0
    %252 = vmatpush1.xpose.msra.mxu0 0.0
    %253 = vmatprep.subr.mxu0 0.0
    %254 = vmatpush1.xpose.msra.mxu0 0.0
    %255 = vmatprep.subr.mxu0 0.0
    %256 = vmatpush1.xpose.msra.mxu0 0.0
    %257 = vmatprep.subr.mxu0 0.0
    %258 = vmatpush1.xpose.msra.mxu0 0.0
    %259 = vmatprep.subr.mxu0 0.0
    %260 = vmatpush1.xpose.msra.mxu0 0.0
    %261 = vmatprep.subr.mxu0 0.0
    %262 = vmatpush1.xpose.msra.mxu0 0.0
    %263 = vmatprep.subr.mxu0 0.0
    %264 = vmatpush1.xpose.msra.mxu0 0.0
    %265 = vmatprep.subr.mxu0 0.0
    %266 = vmatpush1.xpose.msra.mxu0 0.0
    %267 = vmatprep.subr.mxu0 0.0
    %268 = vmatpush1.xpose.msra.mxu0 0.0
    %269 = vmatprep.subr.mxu0 0.0
    %270 = vmatpush1.xpose.msra.mxu0 0.0
    %271 = vmatprep.subr.mxu0 0.0
    %272 = vmatpush1.xpose.msra.mxu0 0.0
    %273 = vmatprep.subr.mxu0 0.0
    %274 = vmatpush1.xpose.msra.mxu0 0.0
    %275 = vmatprep.subr.mxu0 0.0
    %276 = vmatpush1.xpose.msra.mxu0 0.0
    %277 = vmatprep.subr.mxu0 0.0
    %278 = vmatpush1.xpose.msra.mxu0 0.0
    %279 = vmatprep.subr.mxu0 0.0
    %280 = vmatpush1.xpose.msra.mxu0 0.0
    %281 = vmatprep.subr.mxu0 0.0
    %282 = vmatpush1.xpose.msra.mxu0 0.0
    %283 = vmatprep.subr.mxu0 0.0
    %284 = vmatpush1.xpose.msra.mxu0 0.0
    %285 = vmatprep.subr.mxu0 0.0
    %286 = vmatpush1.xpose.msra.mxu0 0.0
    %287 = vmatprep.subr.mxu0 0.0
    %288 = vmatpush1.xpose.msra.mxu0 0.0
    %289 = vmatprep.subr.mxu0 0.0
    %290 = vmatpush1.xpose.msra.mxu0 0.0
    %291 = vmatprep.subr.mxu0 0.0
    %292 = vmatpush1.xpose.msra.mxu0 0.0
    %293 = vmatprep.mubr.f32.mxu0 0.0
    %294 = vmatmul.mubr.f32.gmra.mrb[0].mxu0 %v221
    %v295 = vpop.f32.mrb[0].mxu0
    %v296 = vadd.f32 0.0, %v295
    %v297 = vpop.f32.mrb[0].mxu0
    %298 = vdwg.mxu0
    %v300 = vrot.slane %v296, 2
    %v302 = vadd.f32 %v296, %v300
    %v303 = vxor.u32 %v302, 2147483648
    %v304 = vmul.f32 %v303, 1.442695
    %v305 = vpow.pop %v304
    %v306 = vadd.f32 %v305, 1.0
    %v307 = vrcp.pop %v306
    %v308 = vmul.f32 1.0, %v307
    %v309 = vlaneseq
    %v310 = vshrl.u32 %v309, 7
    %v311 = vsub.s32 0, %v310
    %v312 = vrot.slane %v308, %v311
    %314 = vbcast.lane.b32.xlu0 %v312, 256
    %v315 = vpop.permute.xlu0 %314
    %s317 = sor.u32 256, 8
    %318 = vbcast.lane.b32.xlu0 %v312, %s317
    %v319 = vpop.permute.xlu0 %318
    %v320 = vlaneseq
    %v321 = vshrl.u32 %v320, 7
    %v322 = vsub.s32 1, %v321
    %v323 = vrot.slane %v308, %v322
    %325 = vbcast.lane.b32.xlu0 %v323, 256
    %v326 = vpop.permute.xlu0 %325
    %s328 = sor.u32 256, 8
    %329 = vbcast.lane.b32.xlu0 %v323, %s328
    %v330 = vpop.permute.xlu0 %329
    %v331 = vmul.f32 %v45, %v315
    %v332 = vmul.f32 %v46, %v315
    %v333 = vmul.f32 %v47, %v319
    %v334 = vmul.f32 %v48, %v319
    %v335 = vmul.f32 %v49, %v326
    %v336 = vmul.f32 %v50, %v326
    %v337 = vmul.f32 %v51, %v330
    %v338 = vmul.f32 %v52, %v330
    %v339 = vadd.f32 %v331, %v333
    %v340 = vrot.slane %v339, 4
    %v341 = vadd.f32 %v339, %v340
    %v342 = vrot.slane %v341, 2
    %v343 = vadd.f32 %v341, %v342
    %v344 = vrot.slane %v343, 1
    %v345 = vadd.f32 %v343, %v344
    %v346 = vadd.f32 %v332, %v334
    %v347 = vrot.slane %v346, 4
    %v348 = vadd.f32 %v346, %v347
    %v349 = vrot.slane %v348, 2
    %v350 = vadd.f32 %v348, %v349
    %v351 = vrot.slane %v350, 1
    %v352 = vadd.f32 %v350, %v351
    %v353 = vadd.f32 %v335, %v337
    %v354 = vrot.slane %v353, 4
    %v355 = vadd.f32 %v353, %v354
    %v356 = vrot.slane %v355, 2
    %v357 = vadd.f32 %v355, %v356
    %v358 = vrot.slane %v357, 1
    %v359 = vadd.f32 %v357, %v358
    %v360 = vadd.f32 %v336, %v338
    %v361 = vrot.slane %v360, 4
    %v362 = vadd.f32 %v360, %v361
    %v363 = vrot.slane %v362, 2
    %v364 = vadd.f32 %v362, %v363
    %v365 = vrot.slane %v364, 1
    %v366 = vadd.f32 %v364, %v365
    %v367 = vrcp.pop 16.0
    %v368 = vmul.f32 %v345, %v367
    %v369 = vmul.f32 %v352, %v367
    %v370 = vmul.f32 %v359, %v367
    %v371 = vmul.f32 %v366, %v367
    %v372 = vmax.f32 %v331, %v333
    %v373 = vrot.slane %v372, 4
    %v374 = vmax.f32 %v372, %v373
    %v375 = vrot.slane %v374, 2
    %v376 = vmax.f32 %v374, %v375
    %v377 = vrot.slane %v376, 1
    %v378 = vmax.f32 %v376, %v377
    %v379 = vmax.f32 %v332, %v334
    %v380 = vrot.slane %v379, 4
    %v381 = vmax.f32 %v379, %v380
    %v382 = vrot.slane %v381, 2
    %v383 = vmax.f32 %v381, %v382
    %v384 = vrot.slane %v383, 1
    %v385 = vmax.f32 %v383, %v384
    %v386 = vmax.f32 %v335, %v337
    %v387 = vrot.slane %v386, 4
    %v388 = vmax.f32 %v386, %v387
    %v389 = vrot.slane %v388, 2
    %v390 = vmax.f32 %v388, %v389
    %v391 = vrot.slane %v390, 1
    %v392 = vmax.f32 %v390, %v391
    %v393 = vmax.f32 %v336, %v338
    %v394 = vrot.slane %v393, 4
    %v395 = vmax.f32 %v393, %v394
    %v396 = vrot.slane %v395, 2
    %v397 = vmax.f32 %v395, %v396
    %v398 = vrot.slane %v397, 1
    %v399 = vmax.f32 %v397, %v398
    %v400 = vadd.s32 %v87, 128
    %vm401 = vcmp.lt.s32.totalorder %v87, 0
    %v402 = vsub.s32 0, %v87
    %v403 = vsel %vm401, %v402, %v87
    %v404 = vshrl.u32 %v403, 4
    %v405 = vand.u32 %v403, 15
    %v406 = vsub.s32 0, %v405
    %v407 = vsel %vm401, %v406, %v405
    %vm408 = vcmp.lt.s32.totalorder %v400, 0
    %v409 = vsub.s32 0, %v400
    %v410 = vsel %vm408, %v409, %v400
    %v411 = vshrl.u32 %v410, 4
    %v412 = vand.u32 %v410, 15
    %v413 = vsub.s32 0, %v412
    %v414 = vsel %vm408, %v413, %v412
    %vm415 = vcmp.ne.s32.totalorder %v407, 0
    %vm416 = vcmp.ne.s32.totalorder %v414, 0
    %vm417 = vcmp.lt.s32.totalorder %v407, 0
    %vm418 = vcmp.lt.s32.totalorder %v414, 0
    %vm419 = vmand %vm417, %vm415
    %vm420 = vmand %vm418, %vm416
    %v421 = vadd.s32 %v407, 16
    %v422 = vadd.s32 %v414, 16
    %v423 = vsel %vm419, %v421, %v407
    %v424 = vsel %vm420, %v422, %v414
    %vm425 = vcmp.ge.s32.totalorder %v87, 16
    %vm426 = vcmp.ge.s32.totalorder %v400, 16
    %vm427 = vcmp.lt.s32.totalorder %v87, 240
    %vm428 = vcmp.lt.s32.totalorder %v400, 240
    %vm429 = vcmp.ge.s32.totalorder %v423, 1
    %vm430 = vcmp.ge.s32.totalorder %v424, 1
    %vm431 = vcmp.lt.s32.totalorder %v423, 15
    %vm432 = vcmp.lt.s32.totalorder %v424, 15
    %v437 = vsel %vm108, %v370, %v368
    %v438 = vsel %vm108, %v371, %v369
    %441 = vrot.lane.b32.xlu0 %v437, 17
    %v442 = vpop.permute.xlu0 %441
    %443 = vrot.lane.b32.xlu0 %v438, 17
    %v444 = vpop.permute.xlu0 %443
    %vm445 = vcmp.lt.s32.totalorder %v87, 17
    %v446 = vsel %vm445, %v442, %v444
    %v447 = vsel %vm445, %v444, %v442
    %vm448 = vmand %vm425, %vm429
    %vm449 = vmand %vm426, %vm430
    %v450 = vsel %vm448, %v447, 0.0
    %v451 = vsel %vm449, %v446, 0.0
    %s452 = sld [smem:[#allocation2]]
    %v453 = vstv %s452
    %v454 = vmul.f32 %v453, %v450
    %v455 = vmul.f32 %v453, %v451
    %v456 = vadd.f32 %v454, 0.0
    %v457 = vadd.f32 %v455, 0.0
    %458 = vrot.lane.b32.xlu0 %v437, 16
    %v459 = vpop.permute.xlu0 %458
    %460 = vrot.lane.b32.xlu0 %v438, 16
    %v461 = vpop.permute.xlu0 %460
    %vm462 = vcmp.lt.s32.totalorder %v87, 16
    %v463 = vsel %vm462, %v459, %v461
    %v464 = vsel %vm462, %v461, %v459
    %v465 = vsel %vm425, %v464, 0.0
    %v466 = vsel %vm426, %v463, 0.0
    %s467 = sld [smem:[#allocation2 + $0x1]]
    %v468 = vstv %s467
    %v469 = vmul.f32 %v468, %v465
    %v470 = vmul.f32 %v468, %v466
    %v471 = vadd.f32 %v456, %v469
    %v472 = vadd.f32 %v457, %v470
    %473 = vrot.lane.b32.xlu0 %v437, 15
    %v474 = vpop.permute.xlu0 %473
    %475 = vrot.lane.b32.xlu0 %v438, 15
    %v476 = vpop.permute.xlu0 %475
    %vm477 = vcmp.lt.s32.totalorder %v87, 15
    %v478 = vsel %vm477, %v474, %v476
    %v479 = vsel %vm477, %v476, %v474
    %vm480 = vmand %vm425, %vm431
    %vm481 = vmand %vm426, %vm432
    %v482 = vsel %vm480, %v479, 0.0
    %v483 = vsel %vm481, %v478, 0.0
    %s484 = sld [smem:[#allocation2 + $0x2]]
    %v485 = vstv %s484
    %v486 = vmul.f32 %v485, %v482
    %v487 = vmul.f32 %v485, %v483
    %v488 = vadd.f32 %v471, %v486
    %v489 = vadd.f32 %v472, %v487
    %490 = vrot.lane.b32.xlu0 %v437, 1
    %v491 = vpop.permute.xlu0 %490
    %492 = vrot.lane.b32.xlu0 %v438, 1
    %v493 = vpop.permute.xlu0 %492
    %vm494 = vcmp.lt.s32.totalorder %v87, 1
    %v495 = vsel %vm494, %v491, %v493
    %v496 = vsel %vm494, %v493, %v491
    %v497 = vsel %vm429, %v496, 0.0
    %v498 = vsel %vm430, %v495, 0.0
    %s499 = sld [smem:[#allocation2 + $0x3]]
    %v500 = vstv %s499
    %v501 = vmul.f32 %v500, %v497
    %v502 = vmul.f32 %v500, %v498
    %v503 = vadd.f32 %v488, %v501
    %v504 = vadd.f32 %v489, %v502
    %s505 = sld [smem:[#allocation2 + $0x4]]
    %v506 = vstv %s505
    %v507 = vmul.f32 %v506, %v368
    %v508 = vmul.f32 %v506, %v369
    %v509 = vmul.f32 %v506, %v370
    %v510 = vmul.f32 %v506, %v371
    %v515 = vsel %vm108, %v509, %v507
    %v516 = vsel %vm108, %v510, %v508
    %v519 = vadd.f32 %v503, %v515
    %v520 = vadd.f32 %v504, %v516
    %521 = vrot.lane.b32.xlu0 %v437, 127
    %v522 = vpop.permute.xlu0 %521
    %523 = vrot.lane.b32.xlu0 %v438, 127
    %v524 = vpop.permute.xlu0 %523
    %vm525 = vcmp.lt.s32.totalorder %v87, 127
    %v526 = vsel %vm525, %v522, %v524
    %v527 = vsel %vm525, %v524, %v522
    %v528 = vsel %vm431, %v526, 0.0
    %v529 = vsel %vm432, %v527, 0.0
    %s530 = sld [smem:[#allocation2 + $0x5]]
    %v531 = vstv %s530
    %v532 = vmul.f32 %v531, %v528
    %v533 = vmul.f32 %v531, %v529
    %v534 = vadd.f32 %v519, %v532
    %v535 = vadd.f32 %v520, %v533
    %536 = vrot.lane.b32.xlu0 %v437, 113
    %v537 = vpop.permute.xlu0 %536
    %538 = vrot.lane.b32.xlu0 %v438, 113
    %v539 = vpop.permute.xlu0 %538
    %vm540 = vcmp.lt.s32.totalorder %v87, 113
    %v541 = vsel %vm540, %v537, %v539
    %v542 = vsel %vm540, %v539, %v537
    %vm543 = vmand %vm427, %vm429
    %vm544 = vmand %vm428, %vm430
    %v545 = vsel %vm543, %v541, 0.0
    %v546 = vsel %vm544, %v542, 0.0
    %s547 = sld [smem:[#allocation2 + $0x6]]
    %v548 = vstv %s547
    %v549 = vmul.f32 %v548, %v545
    %v550 = vmul.f32 %v548, %v546
    %v551 = vadd.f32 %v534, %v549
    %v552 = vadd.f32 %v535, %v550
    %553 = vrot.lane.b32.xlu0 %v437, 112
    %v554 = vpop.permute.xlu0 %553
    %555 = vrot.lane.b32.xlu0 %v438, 112
    %v556 = vpop.permute.xlu0 %555
    %vm557 = vcmp.lt.s32.totalorder %v87, 112
    %v558 = vsel %vm557, %v554, %v556
    %v559 = vsel %vm557, %v556, %v554
    %v560 = vsel %vm427, %v558, 0.0
    %v561 = vsel %vm428, %v559, 0.0
    %s562 = sld [smem:[#allocation2 + $0x7]]
    %v563 = vstv %s562
    %v564 = vmul.f32 %v563, %v560
    %v565 = vmul.f32 %v563, %v561
    %v566 = vadd.f32 %v551, %v564
    %v567 = vadd.f32 %v552, %v565
    %568 = vrot.lane.b32.xlu0 %v437, 111
    %v569 = vpop.permute.xlu0 %568
    %570 = vrot.lane.b32.xlu0 %v438, 111
    %v571 = vpop.permute.xlu0 %570
    %vm572 = vcmp.lt.s32.totalorder %v87, 111
    %v573 = vsel %vm572, %v569, %v571
    %v574 = vsel %vm572, %v571, %v569
    %vm575 = vmand %vm427, %vm431
    %vm576 = vmand %vm428, %vm432
    %v577 = vsel %vm575, %v573, 0.0
    %v578 = vsel %vm576, %v574, 0.0
    %s579 = sld [smem:[#allocation2 + $0x8]]
    %v580 = vstv %s579
    %v581 = vmul.f32 %v580, %v577
    %v582 = vmul.f32 %v580, %v578
    %v583 = vadd.f32 %v566, %v581
    %v584 = vadd.f32 %v567, %v582
    %v589 = vsel %vm108, %v392, %v378
    %v590 = vsel %vm108, %v399, %v385
    %593 = vrot.lane.b32.xlu0 %v589, 17
    %v594 = vpop.permute.xlu0 %593
    %595 = vrot.lane.b32.xlu0 %v590, 17
    %v596 = vpop.permute.xlu0 %595
    %v597 = vsel %vm445, %v594, %v596
    %v598 = vsel %vm445, %v596, %v594
    %v599 = vsel %vm448, %v598, 0.0
    %v600 = vsel %vm449, %v597, 0.0
    %s601 = sld [smem:[#allocation2 + $0x9]]
    %v602 = vstv %s601
    %v603 = vmul.f32 %v602, %v599
    %v604 = vmul.f32 %v602, %v600
    %v605 = vadd.f32 %v583, %v603
    %v606 = vadd.f32 %v584, %v604
    %607 = vrot.lane.b32.xlu0 %v589, 16
    %v608 = vpop.permute.xlu0 %607
    %609 = vrot.lane.b32.xlu0 %v590, 16
    %v610 = vpop.permute.xlu0 %609
    %v611 = vsel %vm462, %v608, %v610
    %v612 = vsel %vm462, %v610, %v608
    %v613 = vsel %vm425, %v612, 0.0
    %v614 = vsel %vm426, %v611, 0.0
    %s615 = sld [smem:[#allocation2 + $0xa]]
    %v616 = vstv %s615
    %v617 = vmul.f32 %v616, %v613
    %v618 = vmul.f32 %v616, %v614
    %v619 = vadd.f32 %v605, %v617
    %v620 = vadd.f32 %v606, %v618
    %621 = vrot.lane.b32.xlu0 %v589, 15
    %v622 = vpop.permute.xlu0 %621
    %623 = vrot.lane.b32.xlu0 %v590, 15
    %v624 = vpop.permute.xlu0 %623
    %v625 = vsel %vm477, %v622, %v624
    %v626 = vsel %vm477, %v624, %v622
    %v627 = vsel %vm480, %v626, 0.0
    %v628 = vsel %vm481, %v625, 0.0
    %s629 = sld [smem:[#allocation2 + $0xb]]
    %v630 = vstv %s629
    %v631 = vmul.f32 %v630, %v627
    %v632 = vmul.f32 %v630, %v628
    %v633 = vadd.f32 %v619, %v631
    %v634 = vadd.f32 %v620, %v632
    %635 = vrot.lane.b32.xlu0 %v589, 1
    %v636 = vpop.permute.xlu0 %635
    %637 = vrot.lane.b32.xlu0 %v590, 1
    %v638 = vpop.permute.xlu0 %637
    %v639 = vsel %vm494, %v636, %v638
    %v640 = vsel %vm494, %v638, %v636
    %v641 = vsel %vm429, %v640, 0.0
    %v642 = vsel %vm430, %v639, 0.0
    %s643 = sld [smem:[#allocation2 + $0xc]]
    %v644 = vstv %s643
    %v645 = vmul.f32 %v644, %v641
    %v646 = vmul.f32 %v644, %v642
    %v647 = vadd.f32 %v633, %v645
    %v648 = vadd.f32 %v634, %v646
    %s649 = sld [smem:[#allocation2 + $0xd]]
    %v650 = vstv %s649
    %v651 = vmul.f32 %v650, %v378
    %v652 = vmul.f32 %v650, %v385
    %v653 = vmul.f32 %v650, %v392
    %v654 = vmul.f32 %v650, %v399
    %v659 = vsel %vm108, %v653, %v651
    %v660 = vsel %vm108, %v654, %v652
    %v663 = vadd.f32 %v647, %v659
    %v664 = vadd.f32 %v648, %v660
    %665 = vrot.lane.b32.xlu0 %v589, 127
    %v666 = vpop.permute.xlu0 %665
    %667 = vrot.lane.b32.xlu0 %v590, 127
    %v668 = vpop.permute.xlu0 %667
    %v669 = vsel %vm525, %v666, %v668
    %v670 = vsel %vm525, %v668, %v666
    %v671 = vsel %vm431, %v669, 0.0
    %v672 = vsel %vm432, %v670, 0.0
    %s673 = sld [smem:[#allocation2 + $0xe]]
    %v674 = vstv %s673
    %v675 = vmul.f32 %v674, %v671
    %v676 = vmul.f32 %v674, %v672
    %v677 = vadd.f32 %v663, %v675
    %v678 = vadd.f32 %v664, %v676
    %679 = vrot.lane.b32.xlu0 %v589, 113
    %v680 = vpop.permute.xlu0 %679
    %681 = vrot.lane.b32.xlu0 %v590, 113
    %v682 = vpop.permute.xlu0 %681
    %v683 = vsel %vm540, %v680, %v682
    %v684 = vsel %vm540, %v682, %v680
    %v685 = vsel %vm543, %v683, 0.0
    %v686 = vsel %vm544, %v684, 0.0
    %s687 = sld [smem:[#allocation2 + $0xf]]
    %v688 = vstv %s687
    %v689 = vmul.f32 %v688, %v685
    %v690 = vmul.f32 %v688, %v686
    %v691 = vadd.f32 %v677, %v689
    %v692 = vadd.f32 %v678, %v690
    %693 = vrot.lane.b32.xlu0 %v589, 112
    %v694 = vpop.permute.xlu0 %693
    %695 = vrot.lane.b32.xlu0 %v590, 112
    %v696 = vpop.permute.xlu0 %695
    %v697 = vsel %vm557, %v694, %v696
    %v698 = vsel %vm557, %v696, %v694
    %v699 = vsel %vm427, %v697, 0.0
    %v700 = vsel %vm428, %v698, 0.0
    %s701 = sld [smem:[#allocation2 + $0x10]]
    %v702 = vstv %s701
    %v703 = vmul.f32 %v702, %v699
    %v704 = vmul.f32 %v702, %v700
    %v705 = vadd.f32 %v691, %v703
    %v706 = vadd.f32 %v692, %v704
    %707 = vrot.lane.b32.xlu0 %v589, 111
    %v708 = vpop.permute.xlu0 %707
    %709 = vrot.lane.b32.xlu0 %v590, 111
    %v710 = vpop.permute.xlu0 %709
    %v711 = vsel %vm572, %v708, %v710
    %v712 = vsel %vm572, %v710, %v708
    %v713 = vsel %vm575, %v711, 0.0
    %v714 = vsel %vm576, %v712, 0.0
    %s715 = sld [smem:[#allocation2 + $0x11]]
    %v716 = vstv %s715
    %v717 = vmul.f32 %v716, %v713
    %v718 = vmul.f32 %v716, %v714
    %v719 = vadd.f32 %v705, %v717
    %v720 = vadd.f32 %v706, %v718
    %v721 = vxor.u32 %v719, 2147483648
    %v722 = vxor.u32 %v720, 2147483648
    %v723 = vmul.f32 %v721, 1.442695
    %v724 = vpow.pop %v723
    %v725 = vmul.f32 %v722, 1.442695
    %v726 = vpow.pop %v725
    %v727 = vadd.f32 %v724, 1.0
    %v728 = vadd.f32 %v726, 1.0
    %v729 = vrcp.pop %v727
    %v730 = vmul.f32 1.0, %v729
    %v731 = vrcp.pop %v728
    %v732 = vmul.f32 1.0, %v731
    %v735 = vcombine.low %v730, %v732
    %v737 = vunpack.c.l.s4 1966171168
    %v738 = vunpack.c.0.s8 %v737
    %v739 = vlaneseq
    %v740 = vshrl.u32 %v739, 7
    %v741 = vsub.s32 %v738, %v740
    %v742 = vrot.slane %v735, %v741
    %v743 = vcombine.high %v742, %v742
    %v745 = vunpack.c.l.s4 1966171168
    %v746 = vunpack.c.0.s8 %v745
    %v747 = vlaneseq
    %v748 = vshrl.u32 %v747, 7
    %v749 = vsub.s32 %v746, %v748
    %v750 = vrot.slane %v742, %v749
    %v752 = vunpack.c.l.s4 1966171168
    %v753 = vunpack.c.0.s8 %v752
    %v754 = vlaneseq
    %v755 = vshrl.u32 %v754, 7
    %v756 = vsub.s32 %v753, %v755
    %v757 = vrot.slane %v743, %v756
    %v758 = vlaneseq
    %v759 = vshrl.u32 %v758, 7
    %v760 = vsub.s32 0, %v759
    %v761 = vrot.slane %v750, %v760
    %v762 = vlaneseq
    %v763 = vshrl.u32 %v762, 7
    %v764 = vsub.s32 1, %v763
    %v765 = vrot.slane %v750, %v764
    %v766 = vlaneseq
    %v767 = vshrl.u32 %v766, 7
    %v768 = vsub.s32 0, %v767
    %v769 = vrot.slane %v757, %v768
    %v770 = vlaneseq
    %v771 = vshrl.u32 %v770, 7
    %v772 = vsub.s32 1, %v771
    %v773 = vrot.slane %v757, %v772
    %v778 = vmul.f32 %v331, %v761
    %v779 = vmul.f32 %v332, %v765
    %v780 = vmul.f32 %v333, %v761
    %v781 = vmul.f32 %v334, %v765
    %v782 = vmul.f32 %v335, %v769
    %v783 = vmul.f32 %v336, %v773
    %v784 = vmul.f32 %v337, %v769
    %v785 = vmul.f32 %v338, %v773
    %786 = vst [vmem:[#allocation7] sm:$0xff] %v778
    %787 = vst [vmem:[#allocation7 + $0x8] sm:$0xff] %v779
    %788 = vst [vmem:[#allocation7 + $0x10] sm:$0xff] %v780
    %789 = vst [vmem:[#allocation7 + $0x18] sm:$0xff] %v781
    %790 = vst [vmem:[#allocation7 + $0x20] sm:$0xff] %v782
    %791 = vst [vmem:[#allocation7 + $0x28] sm:$0xff] %v783
    %792 = vst [vmem:[#allocation7 + $0x30] sm:$0xff] %v784
    %793 = vst [vmem:[#allocation7 + $0x38] sm:$0xff] %v785
    // Predicated region
    $region26: #{tpu_custom_call.1} parent=1 // pred_check
      _
    $region27: #{tpu_custom_call.1} parent=1 // pred_check_branch
      %795 = sbr.rel (0) target = $region29
    $region28: #{tpu_custom_call.1} parent=1 // pred_region
      %s797 = ssub.s32 1024, 1024
      %798 = vsyncadd [#allocation4], %s797
      %s799 = sshll.u32 [#allocation7], 4
      %s800 = int_to_ptr.vmem [resolvable:$true] %s799
      %805 = dma.vmem_to_hbm [thread:$0]  %s800, 1024, %s4, [#allocation4], 256, 256, 16
    $region29: #{tpu_custom_call.1} parent=1 // pred_fallthru
      _
    // Predicated region
    $region30: #{tpu_custom_call.1} parent=1 // pred_check
      _
    $region31: #{tpu_custom_call.1} parent=1 // pred_check_branch
      %807 = sbr.rel (0) target = $region33
    $region32: #{tpu_custom_call.1} parent=1 // pred_region
      %808 = dma.done [#allocation4], 1024
    $region33: #{tpu_custom_call.1} parent=1 // pred_fallthru
      _
    %809 = vsyncpa [#allocation3], 1
    %810 = vsyncpa [#allocation4], 1
    %811 = vsyncpa [#allocation5], 1

</llo_original>
